<compile_context>
chip_gen: v7x
topology: tpu7x:2x2x1
jax: 0.10.0
libtpu: 0.0.40
codegen_flags: <defaults>
</compile_context>

<pallas_src>
import functools

import numpy as np
import jax
import jax.numpy as jnp
from jax.experimental import pallas as pl
from jax.experimental.pallas import tpu as pltpu


def _round_up(x, m):
    return (x + m - 1) // m * m


def _gumbel_quantize_kernel(x_ref, g_ref, w_ref, b_ref, e_ref,
                            zq_ref, sh_ref, loss_ref, acc_ref,
                            *, tau, vocab, kld_scale, n_rows, tile_rows, hard):
    c = pl.program_id(0)      # codebook index  (slow axis)
    i = pl.program_id(1)      # row-tile index  (fast axis; carries the loss reduction)

    # ---- init resident scalar loss accumulator (SMEM scratch) ----------------
    @pl.when(jnp.logical_and(c == 0, i == 0))
    def _():
        acc_ref[0] = jnp.float32(0.0)

    # ---- projection (Conv1d kernel=1 == matmul), f32 accumulate on the MXU ----
    x = x_ref[...].astype(jnp.float32)                      # (TM, D); bf16-in-HBM ok
    w = w_ref[...].astype(jnp.float32)                      # (D, Vp)
    logits = jnp.dot(x, w, preferred_element_type=jnp.float32) + b_ref[...]   # (TM, Vp)

    # ---- noise-free softmax -> KL-to-uniform diversity loss -------------------
    m = jnp.max(logits, axis=-1, keepdims=True)
    ex = jnp.exp(logits - m)
    q = ex / jnp.sum(ex, axis=-1, keepdims=True)            # padded lanes are exactly 0
    kl_row = jnp.sum(q * jnp.log(q * jnp.float32(vocab) + 1e-10),
                     axis=-1, keepdims=True)                # (TM, 1)

    # mask rows that only exist because of row padding of the last tile
    row_ids = i * tile_rows + jax.lax.broadcasted_iota(jnp.int32, (tile_rows, 1), 0)
    row_valid = (row_ids < n_rows).astype(jnp.float32)
    acc_ref[0] += jnp.sum(kl_row * row_valid)

    # ---- gumbel softmax --------------------------------------------------------
    y_logits = (logits + g_ref[...]) * jnp.float32(1.0 / tau)
    my = jnp.max(y_logits, axis=-1, keepdims=True)
    ey = jnp.exp(y_logits - my)
    y_soft = ey / jnp.sum(ey, axis=-1, keepdims=True)

    if hard:
        # straight-through / eval mode: forward value is the hard one-hot.
        lane = jax.lax.broadcasted_iota(jnp.int32, y_logits.shape, 1)
        amax = jnp.min(jnp.where(y_logits == my, lane, jnp.int32(y_logits.shape[-1])),
                       axis=-1, keepdims=True)               # first argmax (tie-break low)
        y = (lane == amax).astype(jnp.float32)
    else:
        y = y_soft

    sh_ref[...] = y.astype(sh_ref.dtype)                     # (TM, Vp), lane-dense store

    # ---- z_q = soft_one_hot @ embed -------------------------------------------
    zq = jnp.dot(y, e_ref[...].astype(jnp.float32), preferred_element_type=jnp.float32)
    zq_ref[...] = zq.astype(zq_ref.dtype)                    # (TM, Ep), lane-dense store

    # ---- finalize scalar loss on the very last grid step -----------------------
    @pl.when(jnp.logical_and(c == pl.num_programs(0) - 1, i == pl.num_programs(1) - 1))
    def _():
        loss_ref[0, 0] = acc_ref[0] * jnp.float32(kld_scale / n_rows)


def gumbel_quantizer_forward(seq, proj_w, proj_b, embed_w, noise_key, *,
                             tau=1.0, kld_scale=5e-4, hard=True,
                             pretraining_targets=1, block_rows=512):
    """Pallas forward of GumbelQuantizer.

    seq:     (B, T, D) encoder output (f32 or bf16)
    proj_w:  (Cb, V, D) Conv1d(D, V, 1) weights (kernel dim squeezed)
    proj_b:  (Cb, V)    Conv1d biases
    embed_w: (Cb, V, E) codebook embeddings
    Returns (output, loss) like the torch module.
    `block_rows`: rows per tile; lower it on v7x (64 MiB VMEM) if N is huge.
    """
    if pretraining_targets == 0:          # self.quantizers is None
        return seq, jnp.float32(0.0)

    B, T, D = seq.shape
    Cb, V, _ = proj_w.shape
    E = embed_w.shape[-1]
    N = B * T

    Vp = _round_up(V, 128)                              # lane-dense class axis
    Ep = _round_up(E, 128)                              # lane-dense z_q output
    TM = min(_round_up(block_rows, 8), _round_up(N, 8))
    Np = _round_up(N, TM)
    n_tiles = Np // TM

    # ---- padded, lane-dense operands (class axis last -> TPU lanes) -----------
    x = jnp.zeros((Np, D), seq.dtype).at[:N].set(seq.reshape(N, D))
    w = (jnp.zeros((Cb, D, Vp), jnp.float32)
         .at[:, :, :V].set(jnp.transpose(proj_w, (0, 2, 1)).astype(jnp.float32)))
    b = (jnp.full((Cb, 1, Vp), -1e9, jnp.float32)       # padded classes -> prob exactly 0
         .at[:, 0, :V].set(proj_b.astype(jnp.float32)))
    e = (jnp.zeros((Cb, Vp, Ep), jnp.float32)
         .at[:, :V, :E].set(embed_w.astype(jnp.float32)))
    g = jnp.zeros((Cb, Np, Vp), jnp.float32).at[:, :N, :V].set(
        jax.random.gumbel(noise_key, (Cb, N, V), dtype=jnp.float32))

    kernel = functools.partial(
        _gumbel_quantize_kernel, tau=float(tau), vocab=V, kld_scale=float(kld_scale),
        n_rows=N, tile_rows=TM, hard=bool(hard))

    in_bytes = int(x.size) * int(x.dtype.itemsize) + 4 * int(g.size + w.size + b.size + e.size)
    out_bytes = 4 * (Cb * Np * Ep + Cb * Np * Vp + 1)
    cost = pl.CostEstimate(
        flops=int(2 * Cb * Np * Vp * (D + Ep) + 12 * Cb * Np * Vp),
        transcendentals=int(3 * Cb * Np * Vp),
        bytes_accessed=int(in_bytes + out_bytes))

    grid_spec = pltpu.PrefetchScalarGridSpec(
        num_scalar_prefetch=0,
        grid=(Cb, n_tiles),                    # weights resident across the inner row loop
        in_specs=[
            pl.BlockSpec((TM, D), lambda c, i: (i, 0)),            # activations
            pl.BlockSpec((None, TM, Vp), lambda c, i: (c, i, 0)),   # gumbel noise
            pl.BlockSpec((None, D, Vp), lambda c, i: (c, 0, 0)),    # proj weight
            pl.BlockSpec((None, 1, Vp), lambda c, i: (c, 0, 0)),    # proj bias
            pl.BlockSpec((None, Vp, Ep), lambda c, i: (c, 0, 0)),   # codebook embeddings
        ],
        out_specs=[
            pl.BlockSpec((None, TM, Ep), lambda c, i: (c, i, 0)),   # quantized rows
            pl.BlockSpec((None, TM, Vp), lambda c, i: (c, i, 0)),   # (soft) one-hot rows
            pl.BlockSpec((1, 1), lambda c, i: (0, 0),
                         memory_space=pltpu.MemorySpace.SMEM),      # scalar loss
        ],
        scratch_shapes=[pltpu.SMEM((1,), jnp.float32)],            # loss accumulator
    )

    zq, sh, loss = pl.pallas_call(
        kernel,
        grid_spec=grid_spec,
        out_shape=(jax.ShapeDtypeStruct((Cb, Np, Ep), jnp.float32),
                   jax.ShapeDtypeStruct((Cb, Np, Vp), jnp.float32),
                   jax.ShapeDtypeStruct((1, 1), jnp.float32)),
        compiler_params=pltpu.CompilerParams(
            dimension_semantics=("arbitrary", "arbitrary")),
        cost_estimate=cost,
    )(x, g, w, b, e)

    feats = zq[:, :N, :E] if pretraining_targets == 1 else sh[:, :N, :V]
    # == torch.cat(per-codebook, dim=1).transpose(1, 2) -> (B, T, Cb*dim), codebook-major
    out = jnp.transpose(feats, (1, 0, 2)).reshape(B, T, -1)
    return out, loss[0, 0]


def _reference_forward(seq, proj_w, proj_b, embed_w, noise_key, *,
                       tau, kld_scale, hard, pretraining_targets):
    """Pure-JAX reference mirroring the PyTorch GumbelQuantizer forward."""
    if pretraining_targets == 0:
        return seq, jnp.float32(0.0)
    B, T, D = seq.shape
    Cb, V, _ = proj_w.shape
    x = seq.reshape(B * T, D).astype(jnp.float32)
    g = jax.random.gumbel(noise_key, (Cb, B * T, V), dtype=jnp.float32)
    outs, loss = [], jnp.float32(0.0)
    for c in range(Cb):
        logits = jnp.dot(x, proj_w[c].T.astype(jnp.float32),
                         precision=jax.lax.Precision.HIGHEST) + proj_b[c].astype(jnp.float32)
        y_soft = jax.nn.softmax((logits + g[c]) / tau, axis=-1)
        if hard:
            y = jax.nn.one_hot(jnp.argmax(logits + g[c], axis=-1), V, dtype=jnp.float32)
        else:
            y = y_soft
        zq = jnp.dot(y, embed_w[c].astype(jnp.float32),
                     precision=jax.lax.Precision.HIGHEST)
        q = jax.nn.softmax(logits, axis=-1)
        loss = loss + kld_scale * jnp.mean(jnp.sum(q * jnp.log(q * V + 1e-10), axis=-1))
        outs.append(zq if pretraining_targets == 1 else y)
    out = jnp.stack(outs, axis=1).reshape(B, T, -1)
    return out, loss


if __name__ == "__main__":
    # Small deterministic example: batch=2, seq=23, encoder_dim=32,
    # vocab=16, embedding_dim=8, codebooks=2.
    B, T, D = 2, 23, 32
    V, E, Cb = 16, 8, 2
    tau, kld_scale = 1.0, 5e-4

    root = jax.random.PRNGKey(0)
    k_seq, k_w, k_b, k_e, k_noise = jax.random.split(root, 5)
    seq = jax.random.normal(k_seq, (B, T, D), dtype=jnp.float32)
    proj_w = jax.random.normal(k_w, (Cb, V, D), dtype=jnp.float32) * 0.2
    proj_b = jax.random.normal(k_b, (Cb, V), dtype=jnp.float32) * 0.1
    embed_w = jax.random.normal(k_e, (Cb, V, E), dtype=jnp.float32)

    # --- soft path (training, straight_through=False): compare against reference ---
    out_s, loss_s = gumbel_quantizer_forward(
        seq, proj_w, proj_b, embed_w, k_noise, tau=tau, kld_scale=kld_scale,
        hard=False, pretraining_targets=1, block_rows=16)
    out_s, loss_s = jax.block_until_ready((out_s, loss_s))
    ref_out, ref_loss = _reference_forward(
        seq, proj_w, proj_b, embed_w, k_noise, tau=tau, kld_scale=kld_scale,
        hard=False, pretraining_targets=1)
    ref_out, ref_loss = jax.block_until_ready((ref_out, ref_loss))
    assert out_s.shape == (B, T, Cb * E)
    assert np.allclose(np.asarray(out_s), np.asarray(ref_out), rtol=1e-2, atol=1e-2)
    assert np.allclose(np.asarray(loss_s), np.asarray(ref_loss), rtol=5e-2, atol=1e-7)

    # --- hard path (eval / straight-through forward value), pretraining_targets==2 ---
    out_h, loss_h = gumbel_quantizer_forward(
        seq, proj_w, proj_b, embed_w, k_noise, tau=tau, kld_scale=kld_scale,
        hard=True, pretraining_targets=2, block_rows=16)
    out_h, loss_h = jax.block_until_ready((out_h, loss_h))
    oh = np.asarray(out_h).reshape(B, T, Cb, V)
    assert np.allclose(oh.sum(-1), 1.0)                       # valid one-hot rows
    assert np.allclose(np.sort(oh, axis=-1)[..., -1], 1.0)
    assert np.allclose(np.asarray(loss_h), np.asarray(loss_s))  # loss is noise-independent

    # --- pretraining_targets == 0 path (quantizers is None) ---
    out0, loss0 = gumbel_quantizer_forward(
        seq, proj_w, proj_b, embed_w, k_noise, pretraining_targets=0)
    assert np.allclose(np.asarray(out0), np.asarray(seq)) and float(loss0) == 0.0

    print("KERNEL_OK")
</pallas_src>

<mosaic_0001>
module attributes {stable_mosaic.version = 11 : i64} {
  func.func @_gumbel_quantize_kernel(%arg0: i32, %arg1: i32, %arg2: memref<16x32xf32, #tpu.memory_space<vmem>>, %arg3: memref<1x16x128xf32, #tpu.memory_space<vmem>>, %arg4: memref<1x32x128xf32, #tpu.memory_space<vmem>>, %arg5: memref<1x1x128xf32, #tpu.memory_space<vmem>>, %arg6: memref<1x128x128xf32, #tpu.memory_space<vmem>>, %arg7: memref<1x16x128xf32, #tpu.memory_space<vmem>>, %arg8: memref<1x16x128xf32, #tpu.memory_space<vmem>>, %arg9: memref<1x1xf32, #tpu.memory_space<smem>>, %arg10: memref<1xf32, #tpu.memory_space<smem>>) attributes {dimension_semantics = [#tpu.dimension_semantics<arbitrary>, #tpu.dimension_semantics<arbitrary>], iteration_bounds = array<i64: 2, 3>, scalar_prefetch = 0 : i64, scratch_operands = 1 : i64, tpu.core_type = #tpu.core_type<tc>, window_params = [{transform_indices = @transform_0, window_bounds = array<i64: 16, 32>}, {transform_indices = @transform_1, window_bounds = array<i64: 1, 16, 128>}, {transform_indices = @transform_2, window_bounds = array<i64: 1, 32, 128>}, {transform_indices = @transform_3, window_bounds = array<i64: 1, 1, 128>}, {transform_indices = @transform_4, window_bounds = array<i64: 1, 128, 128>}, {transform_indices = @transform_5, window_bounds = array<i64: 1, 16, 128>}, {transform_indices = @transform_6, window_bounds = array<i64: 1, 16, 128>}, {transform_indices = @transform_7, window_bounds = array<i64: 1, 1>}]} {
    %c0_i32 = arith.constant 0 : i32
    %0 = arith.cmpi eq, %arg0, %c0_i32 : i32
    %c0_i32_0 = arith.constant 0 : i32
    %1 = arith.cmpi eq, %arg1, %c0_i32_0 : i32
    %2 = arith.andi %0, %1 : i1
    %3 = arith.extui %2 : i1 to i32
    %c0_i32_1 = arith.constant 0 : i32
    %4 = arith.cmpi ne, %3, %c0_i32_1 : i32
    scf.if %4 {
      %cst_34 = arith.constant 0.000000e+00 : f32
      %c0_35 = arith.constant 0 : index
      %74 = memref.load %arg10[%c0_35] : memref<1xf32, #tpu.memory_space<smem>>
      memref.store %cst_34, %arg10[%c0_35] : memref<1xf32, #tpu.memory_space<smem>>
    } else {
    }
    %c0 = arith.constant 0 : index
    %c0_2 = arith.constant 0 : index
    %5 = vector.load %arg2[%c0, %c0_2] : memref<16x32xf32, #tpu.memory_space<vmem>>, vector<16x32xf32>
    %c0_3 = arith.constant 0 : index
    %c0_4 = arith.constant 0 : index
    %c0_5 = arith.constant 0 : index
    %6 = vector.load %arg4[%c0_3, %c0_4, %c0_5] : memref<1x32x128xf32, #tpu.memory_space<vmem>>, vector<1x32x128xf32>
    %7 = vector.shape_cast %6 : vector<1x32x128xf32> to vector<32x128xf32>
    %cst = arith.constant dense<0.000000e+00> : vector<16x128xf32>
    %8 = tpu.matmul %5, %7, %cst {dimension_numbers = #tpu.dot_dimension_numbers<[1], [0], [0], [1], [0, 0, 1, 1], [], []>} : vector<16x32xf32>, vector<32x128xf32>, vector<16x128xf32> -> vector<16x128xf32>
    %c0_6 = arith.constant 0 : index
    %c0_7 = arith.constant 0 : index
    %c0_8 = arith.constant 0 : index
    %9 = vector.load %arg5[%c0_6, %c0_7, %c0_8] : memref<1x1x128xf32, #tpu.memory_space<vmem>>, vector<1x1x128xf32>
    %10 = vector.shape_cast %9 : vector<1x1x128xf32> to vector<1x128xf32>
    %11 = vector.broadcast %10 : vector<1x128xf32> to vector<16x128xf32>
    %12 = arith.addf %8, %11 : vector<16x128xf32>
    %cst_9 = arith.constant dense<0xFF800000> : vector<16xf32>
    %13 = vector.multi_reduction <maximumf>, %12, %cst_9 [1] : vector<16x128xf32> to vector<16xf32>
    %14 = vector.shape_cast %13 : vector<16xf32> to vector<16x1xf32>
    %15 = vector.broadcast %14 : vector<16x1xf32> to vector<16x128xf32>
    %16 = arith.subf %12, %15 : vector<16x128xf32>
    %17 = math.exp %16 : vector<16x128xf32>
    %cst_10 = arith.constant dense<0.000000e+00> : vector<16xf32>
    %18 = vector.multi_reduction <add>, %17, %cst_10 [1] : vector<16x128xf32> to vector<16xf32>
    %19 = vector.shape_cast %18 : vector<16xf32> to vector<16x1xf32>
    %20 = vector.broadcast %19 : vector<16x1xf32> to vector<16x128xf32>
    %21 = arith.divf %17, %20 : vector<16x128xf32>
    %cst_11 = arith.constant 1.600000e+01 : f32
    %22 = vector.broadcast %cst_11 : f32 to vector<16x128xf32>
    %23 = arith.mulf %21, %22 : vector<16x128xf32>
    %cst_12 = arith.constant 1.000000e-10 : f32
    %24 = vector.broadcast %cst_12 : f32 to vector<16x128xf32>
    %25 = arith.addf %23, %24 : vector<16x128xf32>
    %26 = math.log %25 : vector<16x128xf32>
    %27 = arith.mulf %21, %26 : vector<16x128xf32>
    %cst_13 = arith.constant dense<0.000000e+00> : vector<16xf32>
    %28 = vector.multi_reduction <add>, %27, %cst_13 [1] : vector<16x128xf32> to vector<16xf32>
    %29 = vector.shape_cast %28 : vector<16xf32> to vector<16x1xf32>
    %c16_i32 = arith.constant 16 : i32
    %30 = arith.muli %arg1, %c16_i32 : i32
    %31 = tpu.iota {dimensions = array<i32: 0>} : vector<16x1xi32>
    %32 = vector.broadcast %30 : i32 to vector<16x1xi32>
    %33 = arith.addi %32, %31 : vector<16x1xi32>
    %c46_i32 = arith.constant 46 : i32
    %34 = vector.broadcast %c46_i32 : i32 to vector<16x1xi32>
    %35 = arith.cmpi slt, %33, %34 : vector<16x1xi32>
    %36 = arith.extui %35 : vector<16x1xi1> to vector<16x1xi32>
    %37 = arith.sitofp %36 : vector<16x1xi32> to vector<16x1xf32>
    %c0_14 = arith.constant 0 : index
    %38 = memref.load %arg10[%c0_14] : memref<1xf32, #tpu.memory_space<smem>>
    %39 = arith.mulf %29, %37 : vector<16x1xf32>
    %40 = vector.shape_cast %39 : vector<16x1xf32> to vector<1x16x1xf32>
    %cst_15 = arith.constant dense<0.000000e+00> : vector<1xf32>
    %41 = vector.multi_reduction <add>, %40, %cst_15 [1, 2] : vector<1x16x1xf32> to vector<1xf32>
    %42 = vector.shape_cast %41 : vector<1xf32> to vector<1x1x1xf32>
    %43 = vector.extract %42[0, 0, 0] : f32 from vector<1x1x1xf32>
    %44 = arith.addf %38, %43 : f32
    %c0_16 = arith.constant 0 : index
    %45 = memref.load %arg10[%c0_16] : memref<1xf32, #tpu.memory_space<smem>>
    memref.store %44, %arg10[%c0_16] : memref<1xf32, #tpu.memory_space<smem>>
    %c0_17 = arith.constant 0 : index
    %c0_18 = arith.constant 0 : index
    %c0_19 = arith.constant 0 : index
    %46 = vector.load %arg3[%c0_17, %c0_18, %c0_19] : memref<1x16x128xf32, #tpu.memory_space<vmem>>, vector<1x16x128xf32>
    %47 = vector.shape_cast %46 : vector<1x16x128xf32> to vector<16x128xf32>
    %48 = arith.addf %12, %47 : vector<16x128xf32>
    %cst_20 = arith.constant 1.000000e+00 : f32
    %49 = vector.broadcast %cst_20 : f32 to vector<16x128xf32>
    %50 = arith.mulf %48, %49 : vector<16x128xf32>
    %cst_21 = arith.constant dense<0xFF800000> : vector<16xf32>
    %51 = vector.multi_reduction <maximumf>, %50, %cst_21 [1] : vector<16x128xf32> to vector<16xf32>
    %52 = vector.shape_cast %51 : vector<16xf32> to vector<16x1xf32>
    %53 = vector.broadcast %52 : vector<16x1xf32> to vector<16x128xf32>
    %54 = arith.subf %50, %53 : vector<16x128xf32>
    %55 = math.exp %54 : vector<16x128xf32>
    %cst_22 = arith.constant dense<0.000000e+00> : vector<16xf32>
    %56 = vector.multi_reduction <add>, %55, %cst_22 [1] : vector<16x128xf32> to vector<16xf32>
    %57 = vector.shape_cast %56 : vector<16xf32> to vector<16x1xf32>
    %58 = vector.broadcast %57 : vector<16x1xf32> to vector<16x128xf32>
    %59 = arith.divf %55, %58 : vector<16x128xf32>
    %c0_23 = arith.constant 0 : index
    %c0_24 = arith.constant 0 : index
    %c0_25 = arith.constant 0 : index
    %60 = vector.load %arg8[%c0_23, %c0_24, %c0_25] : memref<1x16x128xf32, #tpu.memory_space<vmem>>, vector<1x16x128xf32>
    %61 = vector.shape_cast %60 : vector<1x16x128xf32> to vector<16x128xf32>
    %62 = vector.shape_cast %59 : vector<16x128xf32> to vector<1x16x128xf32>
    tpu.vector_store %arg8[%c0_23, %c0_24, %c0_25], %62 {strides = array<i32>} : memref<1x16x128xf32, #tpu.memory_space<vmem>>, vector<1x16x128xf32>,
    %c0_26 = arith.constant 0 : index
    %c0_27 = arith.constant 0 : index
    %c0_28 = arith.constant 0 : index
    %63 = vector.load %arg6[%c0_26, %c0_27, %c0_28] : memref<1x128x128xf32, #tpu.memory_space<vmem>>, vector<1x128x128xf32>
    %64 = vector.shape_cast %63 : vector<1x128x128xf32> to vector<128x128xf32>
    %cst_29 = arith.constant dense<0.000000e+00> : vector<16x128xf32>
    %65 = tpu.matmul %59, %64, %cst_29 {dimension_numbers = #tpu.dot_dimension_numbers<[1], [0], [0], [1], [0, 0, 1, 1], [], []>} : vector<16x128xf32>, vector<128x128xf32>, vector<16x128xf32> -> vector<16x128xf32>
    %c0_30 = arith.constant 0 : index
    %c0_31 = arith.constant 0 : index
    %c0_32 = arith.constant 0 : index
    %66 = vector.load %arg7[%c0_30, %c0_31, %c0_32] : memref<1x16x128xf32, #tpu.memory_space<vmem>>, vector<1x16x128xf32>
    %67 = vector.shape_cast %66 : vector<1x16x128xf32> to vector<16x128xf32>
    %68 = vector.shape_cast %65 : vector<16x128xf32> to vector<1x16x128xf32>
    tpu.vector_store %arg7[%c0_30, %c0_31, %c0_32], %68 {strides = array<i32>} : memref<1x16x128xf32, #tpu.memory_space<vmem>>, vector<1x16x128xf32>,
    %c1_i32 = arith.constant 1 : i32
    %69 = arith.cmpi eq, %arg0, %c1_i32 : i32
    %c2_i32 = arith.constant 2 : i32
    %70 = arith.cmpi eq, %arg1, %c2_i32 : i32
    %71 = arith.andi %69, %70 : i1
    %72 = arith.extui %71 : i1 to i32
    %c0_i32_33 = arith.constant 0 : i32
    %73 = arith.cmpi ne, %72, %c0_i32_33 : i32
    scf.if %73 {
      %c0_34 = arith.constant 0 : index
      %74 = memref.load %arg10[%c0_34] : memref<1xf32, #tpu.memory_space<smem>>
      %cst_35 = arith.constant 1.08695649E-5 : f32
      %75 = arith.mulf %74, %cst_35 : f32
      %c0_36 = arith.constant 0 : index
      %c0_37 = arith.constant 0 : index
      %76 = memref.load %arg9[%c0_36, %c0_37] : memref<1x1xf32, #tpu.memory_space<smem>>
      memref.store %75, %arg9[%c0_36, %c0_37] : memref<1x1xf32, #tpu.memory_space<smem>>
    } else {
    }
    return
  }
  func.func @transform_0(%arg0: i32, %arg1: i32) -> (i32, i32) {
    %c0_i32 = arith.constant 0 : i32
    %c0_i32_0 = arith.constant 0 : i32
    return %arg1, %c0_i32 : i32, i32
  }
  func.func @transform_1(%arg0: i32, %arg1: i32) -> (i32, i32, i32) {
    %c0_i32 = arith.constant 0 : i32
    %c0_i32_0 = arith.constant 0 : i32
    return %arg0, %arg1, %c0_i32 : i32, i32, i32
  }
  func.func @transform_2(%arg0: i32, %arg1: i32) -> (i32, i32, i32) {
    %c0_i32 = arith.constant 0 : i32
    %c0_i32_0 = arith.constant 0 : i32
    %c0_i32_1 = arith.constant 0 : i32
    return %arg0, %c0_i32, %c0_i32_0 : i32, i32, i32
  }
  func.func @transform_3(%arg0: i32, %arg1: i32) -> (i32, i32, i32) {
    %c0_i32 = arith.constant 0 : i32
    %c0_i32_0 = arith.constant 0 : i32
    %c0_i32_1 = arith.constant 0 : i32
    return %arg0, %c0_i32, %c0_i32_0 : i32, i32, i32
  }
  func.func @transform_4(%arg0: i32, %arg1: i32) -> (i32, i32, i32) {
    %c0_i32 = arith.constant 0 : i32
    %c0_i32_0 = arith.constant 0 : i32
    %c0_i32_1 = arith.constant 0 : i32
    return %arg0, %c0_i32, %c0_i32_0 : i32, i32, i32
  }
  func.func @transform_5(%arg0: i32, %arg1: i32) -> (i32, i32, i32) {
    %c0_i32 = arith.constant 0 : i32
    %c0_i32_0 = arith.constant 0 : i32
    return %arg0, %arg1, %c0_i32 : i32, i32, i32
  }
  func.func @transform_6(%arg0: i32, %arg1: i32) -> (i32, i32, i32) {
    %c0_i32 = arith.constant 0 : i32
    %c0_i32_0 = arith.constant 0 : i32
    return %arg0, %arg1, %c0_i32 : i32, i32, i32
  }
  func.func @transform_7(%arg0: i32, %arg1: i32) -> (i32, i32) {
    %c0_i32 = arith.constant 0 : i32
    %c0_i32_0 = arith.constant 0 : i32
    %c0_i32_1 = arith.constant 0 : i32
    return %c0_i32, %c0_i32_0 : i32, i32
  }
}

</mosaic_0001>

<llo_original>
// kernel: tpu_custom_call.1
$region0: #{tpu_custom_call.1}
  #allocation0 [shape = 'u32[]', space=smem, size = 0x4, offset = 0x4, fixed_abs, tag = 'smem constant byte address 0x4 - core index']
  #allocation1 [shape = 'u32[144,128]{1,0:T(1,128)}', space=vmem, size = 0x12000, scoped, tag = 'internal scratch']
  #allocation2 [shape = 'f32[1]{0:T(128)}', space=smem, size = 0x200, scoped, tag = 'scratch operand']
  %s0 = inlined_call_operand.vmem [shape: f32[48,32], index: 0, kind: input, shape index: {}]
  %s1 = inlined_call_operand.hbm [shape: f32[2,48,128], index: 1, kind: input, shape index: {}]
  %s2 = inlined_call_operand.vmem [shape: f32[2,32,128], index: 2, kind: input, shape index: {}]
  %s3 = inlined_call_operand.vmem [shape: f32[2,1,128], index: 3, kind: input, shape index: {}]
  %s4 = inlined_call_operand.hbm [shape: f32[2,128,128], index: 4, kind: input, shape index: {}]
  %s5 = inlined_call_operand.hbm [shape: f32[2,48,128], index: 5, kind: output, shape index: {0}]
  %s6 = inlined_call_operand.hbm [shape: f32[2,48,128], index: 6, kind: output, shape index: {1}]
  %s7 = inlined_call_operand.hbm [shape: f32[1,1], index: 7, kind: output, shape index: {2}]
  %8 = xla_tuple %s5, %s6, %s7
  %s9 = sld [smem:[#allocation0]]
  $region85: #{tpu_custom_call.1} parent=0
    _
  %s11 = ssub.s32 1, %s9
  %s12 = scalar_select 0, %s11, %s9
  $region1: #{tpu_custom_call.1} parent=0
    #allocation3 [shape = 'u8[16384]{0}', space=vmem, size = 0x4000, scoped, tag = 'input window, operand 1']
    #allocation4 [shape = 's32[2]{0}', space=sflag, size = 0x8, scoped, tag = 'scoped memory for tpu_custom_call.1']
    #allocation5 [shape = 's32[2]{0}', space=sflag, size = 0x8, scoped, tag = 'scoped memory for tpu_custom_call.1']
    #allocation6 [shape = 's32[2]{0}', space=sflag, size = 0x8, scoped, tag = 'scoped memory for tpu_custom_call.1']
    #allocation7 [shape = 'u8[131072]{0}', space=vmem, size = 0x20000, scoped, tag = 'input window, operand 4']
    #allocation8 [shape = 's32[2]{0}', space=sflag, size = 0x8, scoped, tag = 'scoped memory for tpu_custom_call.1']
    #allocation9 [shape = 'u8[16384]{0}', space=vmem, size = 0x4000, scoped, tag = 'output window, operand 0']
    #allocation10 [shape = 'u8[16384]{0}', space=vmem, size = 0x4000, scoped, tag = 'output window, operand 1']
    #allocation11 [shape = 's32[2]{0}', space=sflag, size = 0x8, scoped, tag = 'scoped memory for tpu_custom_call.1']
    #allocation12 [shape = 'u8[512]{0}', space=smem, size = 0x200, scoped, tag = 'output window, operand 2, single buffered']
    %13 = vsyncpa [#allocation4], 0
    %s14 = scalar_lea.sflag [#allocation4], 1
    %15 = vsyncpa %s14, 0
    %16 = vsyncpa [#allocation8], 0
    %s17 = scalar_lea.sflag [#allocation8], 1
    %18 = vsyncpa %s17, 0
    %19 = vsyncpa [#allocation5], 0
    %s20 = scalar_lea.sflag [#allocation5], 1
    %21 = vsyncpa %s20, 0
    %22 = vsyncpa [#allocation11], 0
    %s23 = scalar_lea.sflag [#allocation11], 1
    %24 = vsyncpa %s23, 0
    %25 = vsyncpa [#allocation6], 0
    loop: start=0, step=1, limit=8
    $region2: #{tpu_custom_call.1} parent=1 // loop_pre_header
      _
    $region3: #{tpu_custom_call.1} parent=1 // loop_header
      %s27 = sphi 0, %s31
      %p28 = scmp.ge.s32.totalorder %s27, 8
      %s34 = sphi 0, %s46
      %s35 = sphi 0, %s42
      %s36 = sphi 0, %s34
      %s37 = sphi 0, %s35
      %s38 = sphi 0, %s36
      %s39 = sphi 0, %s37
      %s49 = sphi 0, %s51
      %s52 = sphi 0, %s49
      %s53 = sphi 0, %s52
      %s69 = sphi 0, %s53
      %s77 = sphi 0, %s79
      %s80 = sphi 0, %s77
      %s81 = sphi 0, %s80
      %s97 = sphi 0, %s81
      %s103 = sphi 0, %s105
      %s106 = sphi 0, %s103
      %s107 = sphi 0, %s106
      %s123 = sphi 0, %s107
      %s129 = sphi 0, %s131
      %s132 = sphi 0, %s129
      %s133 = sphi 0, %s132
      %s149 = sphi 0, %s133
      %s155 = sphi 0, %s157
      %s158 = sphi 0, %s155
      %s159 = sphi 0, %s158
      %s175 = sphi 0, %s159
      %s183 = sphi 0, %s185
      %s186 = sphi 0, %s183
      %s187 = sphi 0, %s186
      %s203 = sphi 0, %s187
      %s211 = sphi 0, %s213
      %s214 = sphi 0, %s211
      %s215 = sphi 0, %s214
      %s231 = sphi 0, %s215
      %s235 = sphi 0, %s235
      %s237 = sphi 0, %s235
      %s238 = sphi 0, %s237
      %s252 = sphi 0, %s238
    $region4: #{tpu_custom_call.1} parent=1 // loop_header_branch
      %30 = sbr.rel (%p28) target = $region8
    $region5: #{tpu_custom_call.1} parent=1 // loop_body
      %s32 = ssub.s32 %s27, 1
      %s33 = ssub.s32 %s27, 2
      %s40 = sadd.s32 1, %s35
      %p41 = scmp.ge.s32.totalorder %s40, 3
      %s42 = scalar_select %p41, 0, %s40
      %s43 = sadd.s32 1, %s34
      %s44 = scalar_select %p41, %s43, %s34
      %p45 = scmp.ge.s32.totalorder %s44, 2
      %s46 = scalar_select %p45, 0, %s44
      %s47 = ssub.s32 %s35, %s42
      %p48 = scmp.eq.s32.totalorder %s47, 0
      %s50 = sadd.s32 %s49, 1
      %s51 = scalar_select %p48, %s49, %s50
      %p54 = pneg %p48
      %p55 = scmp.eq.s32.totalorder %s27, 5
      %p56 = por %p54, %p55
      %p57 = scmp.ne.s32.totalorder %s49, %s52
      %p58 = scmp.eq.s32.totalorder %s27, 0
      %p59 = por %p57, %p58
      %p60 = scmp.ne.s32.totalorder %s49, %s52
      %p61 = scmp.eq.s32.totalorder %s32, 5
      %p62 = por %p60, %p61
      %p63 = scmp.ne.s32.totalorder %s52, %s53
      %p64 = scmp.eq.s32.totalorder %s32, 0
      %p65 = por %p63, %p64
      %p66 = scmp.ne.s32.totalorder %s52, %s53
      %p67 = scmp.eq.s32.totalorder %s33, 5
      %p68 = por %p66, %p67
      %p70 = scmp.ne.s32.totalorder %s53, %s69
      %p71 = scmp.eq.s32.totalorder %s33, 0
      %p72 = por %p70, %p71
      %s73 = ssub.s32 %s34, %s46
      %s74 = ssub.s32 %s35, %s42
      %s75 = sor.u32 %s73, %s74
      %p76 = scmp.eq.s32.totalorder %s75, 0
      %s78 = sadd.s32 %s77, 1
      %s79 = scalar_select %p76, %s77, %s78
      %p82 = pneg %p76
      %p83 = scmp.eq.s32.totalorder %s27, 5
      %p84 = por %p82, %p83
      %p85 = scmp.ne.s32.totalorder %s77, %s80
      %p86 = scmp.eq.s32.totalorder %s27, 0
      %p87 = por %p85, %p86
      %p88 = scmp.ne.s32.totalorder %s77, %s80
      %p89 = scmp.eq.s32.totalorder %s32, 5
      %p90 = por %p88, %p89
      %p91 = scmp.ne.s32.totalorder %s80, %s81
      %p92 = scmp.eq.s32.totalorder %s32, 0
      %p93 = por %p91, %p92
      %p94 = scmp.ne.s32.totalorder %s80, %s81
      %p95 = scmp.eq.s32.totalorder %s33, 5
      %p96 = por %p94, %p95
      %p98 = scmp.ne.s32.totalorder %s81, %s97
      %p99 = scmp.eq.s32.totalorder %s33, 0
      %p100 = por %p98, %p99
      %s101 = ssub.s32 %s34, %s46
      %p102 = scmp.eq.s32.totalorder %s101, 0
      %s104 = sadd.s32 %s103, 1
      %s105 = scalar_select %p102, %s103, %s104
      %p108 = pneg %p102
      %p109 = scmp.eq.s32.totalorder %s27, 5
      %p110 = por %p108, %p109
      %p111 = scmp.ne.s32.totalorder %s103, %s106
      %p112 = scmp.eq.s32.totalorder %s27, 0
      %p113 = por %p111, %p112
      %p114 = scmp.ne.s32.totalorder %s103, %s106
      %p115 = scmp.eq.s32.totalorder %s32, 5
      %p116 = por %p114, %p115
      %p117 = scmp.ne.s32.totalorder %s106, %s107
      %p118 = scmp.eq.s32.totalorder %s32, 0
      %p119 = por %p117, %p118
      %p120 = scmp.ne.s32.totalorder %s106, %s107
      %p121 = scmp.eq.s32.totalorder %s33, 5
      %p122 = por %p120, %p121
      %p124 = scmp.ne.s32.totalorder %s107, %s123
      %p125 = scmp.eq.s32.totalorder %s33, 0
      %p126 = por %p124, %p125
      %s127 = ssub.s32 %s34, %s46
      %p128 = scmp.eq.s32.totalorder %s127, 0
      %s130 = sadd.s32 %s129, 1
      %s131 = scalar_select %p128, %s129, %s130
      %p134 = pneg %p128
      %p135 = scmp.eq.s32.totalorder %s27, 5
      %p136 = por %p134, %p135
      %p137 = scmp.ne.s32.totalorder %s129, %s132
      %p138 = scmp.eq.s32.totalorder %s27, 0
      %p139 = por %p137, %p138
      %p140 = scmp.ne.s32.totalorder %s129, %s132
      %p141 = scmp.eq.s32.totalorder %s32, 5
      %p142 = por %p140, %p141
      %p143 = scmp.ne.s32.totalorder %s132, %s133
      %p144 = scmp.eq.s32.totalorder %s32, 0
      %p145 = por %p143, %p144
      %p146 = scmp.ne.s32.totalorder %s132, %s133
      %p147 = scmp.eq.s32.totalorder %s33, 5
      %p148 = por %p146, %p147
      %p150 = scmp.ne.s32.totalorder %s133, %s149
      %p151 = scmp.eq.s32.totalorder %s33, 0
      %p152 = por %p150, %p151
      %s153 = ssub.s32 %s34, %s46
      %p154 = scmp.eq.s32.totalorder %s153, 0
      %s156 = sadd.s32 %s155, 1
      %s157 = scalar_select %p154, %s155, %s156
      %p160 = pneg %p154
      %p161 = scmp.eq.s32.totalorder %s27, 5
      %p162 = por %p160, %p161
      %p163 = scmp.ne.s32.totalorder %s155, %s158
      %p164 = scmp.eq.s32.totalorder %s27, 0
      %p165 = por %p163, %p164
      %p166 = scmp.ne.s32.totalorder %s155, %s158
      %p167 = scmp.eq.s32.totalorder %s32, 5
      %p168 = por %p166, %p167
      %p169 = scmp.ne.s32.totalorder %s158, %s159
      %p170 = scmp.eq.s32.totalorder %s32, 0
      %p171 = por %p169, %p170
      %p172 = scmp.ne.s32.totalorder %s158, %s159
      %p173 = scmp.eq.s32.totalorder %s33, 5
      %p174 = por %p172, %p173
      %p176 = scmp.ne.s32.totalorder %s159, %s175
      %p177 = scmp.eq.s32.totalorder %s33, 0
      %p178 = por %p176, %p177
      %s179 = ssub.s32 %s34, %s46
      %s180 = ssub.s32 %s35, %s42
      %s181 = sor.u32 %s179, %s180
      %p182 = scmp.eq.s32.totalorder %s181, 0
      %s184 = sadd.s32 %s183, 1
      %s185 = scalar_select %p182, %s183, %s184
      %p188 = pneg %p182
      %p189 = scmp.eq.s32.totalorder %s27, 5
      %p190 = por %p188, %p189
      %p191 = scmp.ne.s32.totalorder %s183, %s186
      %p192 = scmp.eq.s32.totalorder %s27, 0
      %p193 = por %p191, %p192
      %p194 = scmp.ne.s32.totalorder %s183, %s186
      %p195 = scmp.eq.s32.totalorder %s32, 5
      %p196 = por %p194, %p195
      %p197 = scmp.ne.s32.totalorder %s186, %s187
      %p198 = scmp.eq.s32.totalorder %s32, 0
      %p199 = por %p197, %p198
      %p200 = scmp.ne.s32.totalorder %s186, %s187
      %p201 = scmp.eq.s32.totalorder %s33, 5
      %p202 = por %p200, %p201
      %p204 = scmp.ne.s32.totalorder %s187, %s203
      %p205 = scmp.eq.s32.totalorder %s33, 0
      %p206 = por %p204, %p205
      %s207 = ssub.s32 %s34, %s46
      %s208 = ssub.s32 %s35, %s42
      %s209 = sor.u32 %s207, %s208
      %p210 = scmp.eq.s32.totalorder %s209, 0
      %s212 = sadd.s32 %s211, 1
      %s213 = scalar_select %p210, %s211, %s212
      %p216 = pneg %p210
      %p217 = scmp.eq.s32.totalorder %s27, 5
      %p218 = por %p216, %p217
      %p219 = scmp.ne.s32.totalorder %s211, %s214
      %p220 = scmp.eq.s32.totalorder %s27, 0
      %p221 = por %p219, %p220
      %p222 = scmp.ne.s32.totalorder %s211, %s214
      %p223 = scmp.eq.s32.totalorder %s32, 5
      %p224 = por %p222, %p223
      %p225 = scmp.ne.s32.totalorder %s214, %s215
      %p226 = scmp.eq.s32.totalorder %s32, 0
      %p227 = por %p225, %p226
      %p228 = scmp.ne.s32.totalorder %s214, %s215
      %p229 = scmp.eq.s32.totalorder %s33, 5
      %p230 = por %p228, %p229
      %p232 = scmp.ne.s32.totalorder %s215, %s231
      %p233 = scmp.eq.s32.totalorder %s33, 0
      %p234 = por %p232, %p233
      %s236 = sadd.s32 %s235, 1
      %p239 = scmp.eq.s32.totalorder %s27, 5
      %p240 = scmp.ne.s32.totalorder %s235, %s237
      %p241 = scmp.eq.s32.totalorder %s27, 0
      %p242 = por %p240, %p241
      %p243 = scmp.ne.s32.totalorder %s235, %s237
      %p244 = scmp.eq.s32.totalorder %s32, 5
      %p245 = por %p243, %p244
      %p246 = scmp.ne.s32.totalorder %s237, %s238
      %p247 = scmp.eq.s32.totalorder %s32, 0
      %p248 = por %p246, %p247
      %p249 = scmp.ne.s32.totalorder %s237, %s238
      %p250 = scmp.eq.s32.totalorder %s33, 5
      %p251 = por %p249, %p250
      %p253 = scmp.ne.s32.totalorder %s238, %s252
      %p254 = scmp.eq.s32.totalorder %s33, 0
      %p255 = por %p253, %p254
      %p256 = scmp.le.s32.totalorder 1, %s27
      %p257 = scmp.lt.s32.totalorder %s27, 7
      %p258 = pnand %p256, %p257
      %p259 = pneg %p258
      // Predicated region
      $region9: #{tpu_custom_call.1} parent=5 // pred_check
        _
      $region10: #{tpu_custom_call.1} parent=5 // pred_check_branch
        %261 = sbr.rel (%p258) target = $region12
      $region11: #{tpu_custom_call.1} parent=5 // pred_region
        %s262 = ssub.s32 %s27, 1
      $region12: #{tpu_custom_call.1} parent=5 // pred_fallthru
        _
      %p263 = scmp.lt.s32.totalorder %s27, 6
      // Predicated region
      $region13: #{tpu_custom_call.1} parent=5 // pred_check
        %p264 = pneg %p263
      $region14: #{tpu_custom_call.1} parent=5 // pred_check_branch
        %266 = sbr.rel (%p264) target = $region16
      $region15: #{tpu_custom_call.1} parent=5 // pred_region
        // Predicated region
        $region17: #{tpu_custom_call.1} parent=15 // pred_check
          %p267 = pneg %p59
        $region18: #{tpu_custom_call.1} parent=15 // pred_check_branch
          %269 = sbr.rel (%p267) target = $region20
        $region19: #{tpu_custom_call.1} parent=15 // pred_region
          %s270 = smul.u32 2, %s35
          %p271 = scmp.lt.s32.totalorder %s270, 5
          %s272 = scalar_select %p271, %s270, 5
          %s273 = smul.addr %s272, 8
          %s274 = scalar_lea.vmem %s0, %s273
          %s275 = smul.u32 2, %s35
        $region20: #{tpu_custom_call.1} parent=15 // pred_fallthru
          _
        // Predicated region
        $region21: #{tpu_custom_call.1} parent=15 // pred_check
          %p276 = pneg %p87
        $region22: #{tpu_custom_call.1} parent=15 // pred_check_branch
          %278 = sbr.rel (%p276) target = $region24
        $region23: #{tpu_custom_call.1} parent=15 // pred_region
          %s279 = sand.u32 %s77, 1
          %s280 = scalar_lea.sflag [#allocation4], %s279
          %s281 = sand.u32 %s77, 1
          %s282 = smul.addr %s281, 16
          %s283 = scalar_lea.vmem [#allocation3], %s282
          %s284 = smul.u32 2, %s35
          %s286 = ssub.s32 256, 256
          %287 = vsyncadd %s280, %s286
          %s288 = smul.addr %s34, 6
          %s289 = sadd.s32 %s284, %s288
          %s290 = smul.addr %s289, 128
          %s291 = scalar_lea.hbm %s1, %s290
          %s292 = sshll.u32 %s283, 4
          %s293 = int_to_ptr.vmem [resolvable:$true] %s292
          %298 = dma.hbm_to_vmem [thread:$0]  %s291, 256, %s293, %s280, 128, 128, 8
        $region24: #{tpu_custom_call.1} parent=15 // pred_fallthru
          _
        // Predicated region
        $region25: #{tpu_custom_call.1} parent=15 // pred_check
          %p299 = pneg %p113
        $region26: #{tpu_custom_call.1} parent=15 // pred_check_branch
          %301 = sbr.rel (%p299) target = $region28
        $region27: #{tpu_custom_call.1} parent=15 // pred_region
          %p302 = scmp.lt.s32.totalorder %s34, 1
          %s303 = scalar_select %p302, %s34, 1
          %s304 = smul.addr %s303, 4
          %s305 = smul.addr %s304, 8
          %s306 = scalar_lea.vmem %s2, %s305
        $region28: #{tpu_custom_call.1} parent=15 // pred_fallthru
          _
        // Predicated region
        $region29: #{tpu_custom_call.1} parent=15 // pred_check
          %p307 = pneg %p139
        $region30: #{tpu_custom_call.1} parent=15 // pred_check_branch
          %309 = sbr.rel (%p307) target = $region32
        $region31: #{tpu_custom_call.1} parent=15 // pred_region
          %p310 = scmp.lt.s32.totalorder %s34, 1
          %s311 = scalar_select %p310, %s34, 1
          %s312 = scalar_lea.vmem %s3, %s311
        $region32: #{tpu_custom_call.1} parent=15 // pred_fallthru
          _
        // Predicated region
        $region33: #{tpu_custom_call.1} parent=15 // pred_check
          %p313 = pneg %p165
        $region34: #{tpu_custom_call.1} parent=15 // pred_check_branch
          %315 = sbr.rel (%p313) target = $region36
        $region35: #{tpu_custom_call.1} parent=15 // pred_region
          %s316 = sand.u32 %s155, 1
          %s317 = scalar_lea.sflag [#allocation8], %s316
          %s318 = sand.u32 %s155, 1
          %s319 = smul.addr %s318, 128
          %s320 = scalar_lea.vmem [#allocation7], %s319
          %s322 = ssub.s32 2048, 2048
          %323 = vsyncadd %s317, %s322
          %s324 = smul.addr %s34, 16
          %s325 = smul.addr %s324, 128
          %s326 = scalar_lea.hbm %s4, %s325
          %s327 = sshll.u32 %s320, 4
          %s328 = int_to_ptr.vmem [resolvable:$true] %s327
          %333 = dma.hbm_to_vmem [thread:$0]  %s326, 2048, %s328, %s317, 128, 128, 8
        $region36: #{tpu_custom_call.1} parent=15 // pred_fallthru
          _
      $region16: #{tpu_custom_call.1} parent=5 // pred_fallthru
        _
      %p334 = scmp.le.s32.totalorder 1, %s27
      %p335 = scmp.lt.s32.totalorder %s27, 7
      %p336 = pnand %p334, %p335
      %p337 = pneg %p336
      // Predicated region
      $region37: #{tpu_custom_call.1} parent=5 // pred_check
        _
      $region38: #{tpu_custom_call.1} parent=5 // pred_check_branch
        %339 = sbr.rel (%p336) target = $region40
      $region39: #{tpu_custom_call.1} parent=5 // pred_region
        %s340 = ssub.s32 %s27, 1
        %s341 = sand.u32 %s80, 1
        %s342 = scalar_lea.sflag [#allocation4], %s341
        %s343 = sand.u32 %s80, 1
        %s344 = smul.addr %s343, 16
        %s345 = scalar_lea.vmem [#allocation3], %s344
        // Predicated region
        $region41: #{tpu_custom_call.1} parent=39 // pred_check
          %p346 = pneg %p93
        $region42: #{tpu_custom_call.1} parent=39 // pred_check_branch
          %348 = sbr.rel (%p346) target = $region44
        $region43: #{tpu_custom_call.1} parent=39 // pred_region
          %349 = dma.done %s342, 256
        $region44: #{tpu_custom_call.1} parent=39 // pred_fallthru
          _
        %s350 = sand.u32 %s158, 1
        %s351 = scalar_lea.sflag [#allocation8], %s350
        %s352 = sand.u32 %s158, 1
        %s353 = smul.addr %s352, 128
        %s354 = scalar_lea.vmem [#allocation7], %s353
        // Predicated region
        $region45: #{tpu_custom_call.1} parent=39 // pred_check
          %p355 = pneg %p171
        $region46: #{tpu_custom_call.1} parent=39 // pred_check_branch
          %357 = sbr.rel (%p355) target = $region48
        $region47: #{tpu_custom_call.1} parent=39 // pred_region
          %358 = dma.done %s351, 2048
        $region48: #{tpu_custom_call.1} parent=39 // pred_fallthru
          _
        %s359 = smul.u32 2, %s37
        %p360 = scmp.lt.s32.totalorder %s359, 5
        %s361 = scalar_select %p360, %s359, 5
        %s362 = smul.addr %s361, 8
        %s363 = scalar_lea.vmem %s0, %s362
        %p364 = pneg %p65
        %p365 = pneg %p62
        %s366 = sand.u32 %s80, 1
        %s367 = scalar_lea.sflag [#allocation4], %s366
        %s368 = sand.u32 %s80, 1
        %s369 = smul.addr %s368, 16
        %s370 = scalar_lea.vmem [#allocation3], %s369
        %p371 = pneg %p93
        %p372 = pneg %p90
        %p373 = scmp.lt.s32.totalorder %s36, 1
        %s374 = scalar_select %p373, %s36, 1
        %s375 = smul.addr %s374, 4
        %s376 = smul.addr %s375, 8
        %s377 = scalar_lea.vmem %s2, %s376
        %p378 = pneg %p119
        %p379 = pneg %p116
        %p380 = scmp.lt.s32.totalorder %s36, 1
        %s381 = scalar_select %p380, %s36, 1
        %s382 = scalar_lea.vmem %s3, %s381
        %p383 = pneg %p145
        %p384 = pneg %p142
        %s385 = sand.u32 %s158, 1
        %s386 = scalar_lea.sflag [#allocation8], %s385
        %s387 = sand.u32 %s158, 1
        %s388 = smul.addr %s387, 128
        %s389 = scalar_lea.vmem [#allocation7], %s388
        %p390 = pneg %p171
        %p391 = pneg %p168
        %p392 = pneg %p199
        %p393 = pneg %p196
        %s394 = sand.u32 %s186, 1
        %s395 = scalar_lea.sflag [#allocation5], %s394
        %s396 = sand.u32 %s186, 1
        %s397 = smul.addr %s396, 16
        %s398 = scalar_lea.vmem [#allocation9], %s397
        %p399 = pneg %p227
        %p400 = pneg %p224
        %s401 = sand.u32 %s214, 1
        %s402 = scalar_lea.sflag [#allocation11], %s401
        %s403 = sand.u32 %s214, 1
        %s404 = smul.addr %s403, 16
        %s405 = scalar_lea.vmem [#allocation10], %s404
        %p406 = pneg %p248
        %p407 = pneg %p245
        %s408 = smul.u32 2, %s37
        %p409 = scmp.lt.s32.totalorder %s408, 5
        %s410 = scalar_select %p409, %s408, 5
        %s411 = smul.addr %s410, 8
        %s412 = scalar_lea.vmem %s0, %s411
        %s413 = smul.u32 2, %s37
        %s414 = smul.u32 2, %s37
        %p415 = scmp.lt.s32.totalorder %s36, 1
        %s416 = scalar_select %p415, %s36, 1
        %s417 = smul.addr %s416, 4
        %s418 = smul.addr %s417, 8
        %s419 = scalar_lea.vmem %s2, %s418
        %p420 = scmp.lt.s32.totalorder %s36, 1
        %s421 = scalar_select %p420, %s36, 1
        %s422 = scalar_lea.vmem %s3, %s421
        %s423 = smul.u32 2, %s37
        %s424 = smul.u32 2, %s37
        %p425 = scmp.eq.s32.totalorder %s36, 0
        %p426 = scmp.eq.s32.totalorder %s37, 0
        %p427 = pnand %p425, %p426
        %p428 = pneg %p427
        // Predicated region
        $region49: #{tpu_custom_call.1} parent=39 // pred_check
          _
        $region50: #{tpu_custom_call.1} parent=39 // pred_check_branch
          %430 = sbr.rel (%p427) target = $region52
        $region51: #{tpu_custom_call.1} parent=39 // pred_region
          %s431 = scalar_lea.smem [#allocation2], 0
          %432 = sst [smem:[%s431]] 0.0
        $region52: #{tpu_custom_call.1} parent=39 // pred_fallthru
          _
        %v433 = vld [vmem:[%s412] sm:$0xff]
        %v434 = vld [vmem:[%s412 + $0x8] sm:$0xff]
        %v435 = vld [vmem:[%s419] sm:$0xff]
        %v436 = vld [vmem:[%s419 + $0x8] sm:$0xff]
        %v437 = vld [vmem:[%s419 + $0x10] sm:$0xff]
        %v438 = vld [vmem:[%s419 + $0x18] sm:$0xff]
        %v439 = vld [vmem:[%s422] sm:$0x1]
        %v441 = vlaneseq
        %v442 = vshrl.u32 %v441, 7
        %v443 = vsub.s32 0, %v442
        %v444 = vrot.slane %v439, %v443
        %vm446 = vcmask 261120
        %v448 = vsel %vm446, %v433, 0
        %v451 = vsel %vm446, %v434, 0
        %453 = vmatprep.subr.mxu0 0.0
        %454 = vmatpush1.msra.mxu0 %v435
        %455 = vmatprep.subr.mxu0 0.0
        %456 = vmatpush1.msra.mxu0 %v436
        %457 = vmatprep.subr.mxu0 0.0
        %458 = vmatpush1.msra.mxu0 %v437
        %459 = vmatprep.subr.mxu0 0.0
        %460 = vmatpush1.msra.mxu0 %v438
        %461 = vmatprep.subr.mxu0 0.0
        %462 = vmatpush1.msra.mxu0 0.0
        %463 = vmatprep.subr.mxu0 0.0
        %464 = vmatpush1.msra.mxu0 0.0
        %465 = vmatprep.subr.mxu0 0.0
        %466 = vmatpush1.msra.mxu0 0.0
        %467 = vmatprep.subr.mxu0 0.0
        %468 = vmatpush1.msra.mxu0 0.0
        %469 = vmatprep.subr.mxu0 0.0
        %470 = vmatpush1.msra.mxu0 0.0
        %471 = vmatprep.subr.mxu0 0.0
        %472 = vmatpush1.msra.mxu0 0.0
        %473 = vmatprep.subr.mxu0 0.0
        %474 = vmatpush1.msra.mxu0 0.0
        %475 = vmatprep.subr.mxu0 0.0
        %476 = vmatpush1.msra.mxu0 0.0
        %477 = vmatprep.subr.mxu0 0.0
        %478 = vmatpush1.msra.mxu0 0.0
        %479 = vmatprep.subr.mxu0 0.0
        %480 = vmatpush1.msra.mxu0 0.0
        %481 = vmatprep.subr.mxu0 0.0
        %482 = vmatpush1.msra.mxu0 0.0
        %483 = vmatprep.subr.mxu0 0.0
        %484 = vmatpush1.msra.mxu0 0.0
        %485 = vmatprep.subr.mxu0 0.0
        %486 = vmatpush1.msra.mxu0 0.0
        %487 = vmatprep.subr.mxu0 0.0
        %488 = vmatpush1.msra.mxu0 0.0
        %489 = vmatprep.subr.mxu0 0.0
        %490 = vmatpush1.msra.mxu0 0.0
        %491 = vmatprep.subr.mxu0 0.0
        %492 = vmatpush1.msra.mxu0 0.0
        %493 = vmatprep.subr.mxu0 0.0
        %494 = vmatpush1.msra.mxu0 0.0
        %495 = vmatprep.subr.mxu0 0.0
        %496 = vmatpush1.msra.mxu0 0.0
        %497 = vmatprep.subr.mxu0 0.0
        %498 = vmatpush1.msra.mxu0 0.0
        %499 = vmatprep.subr.mxu0 0.0
        %500 = vmatpush1.msra.mxu0 0.0
        %501 = vmatprep.subr.mxu0 0.0
        %502 = vmatpush1.msra.mxu0 0.0
        %503 = vmatprep.subr.mxu0 0.0
        %504 = vmatpush1.msra.mxu0 0.0
        %505 = vmatprep.subr.mxu0 0.0
        %506 = vmatpush1.msra.mxu0 0.0
        %507 = vmatprep.subr.mxu0 0.0
        %508 = vmatpush1.msra.mxu0 0.0
        %509 = vmatprep.subr.mxu0 0.0
        %510 = vmatpush1.msra.mxu0 0.0
        %511 = vmatprep.subr.mxu0 0.0
        %512 = vmatpush1.msra.mxu0 0.0
        %513 = vmatprep.subr.mxu0 0.0
        %514 = vmatpush1.msra.mxu0 0.0
        %515 = vmatprep.subr.mxu0 0.0
        %516 = vmatpush1.msra.mxu0 0.0
        %517 = vmatprep.mubr.f32.mxu0 0.0
        %518 = vmatmul.mubr.f32.gmra.mrb[0].mxu0 %v448
        %v519 = vpop.f32.mrb[0].mxu0
        %v520 = vadd.f32 %v444, %v519
        %v521 = vpop.f32.mrb[0].mxu0
        %522 = vmatprep.mubr.f32.mxu0 0.0
        %523 = vmatmul.mubr.f32.gmra.mrb[0].mxu0 %v451
        %v524 = vpop.f32.mrb[0].mxu0
        %v525 = vadd.f32 %v444, %v524
        %v526 = vpop.f32.mrb[0].mxu0
        %527 = vdwg.mxu0
        %528 = vmax.xlane.f32.xlu0 %v520
        %v529 = vpop.xlane.xlu0 %528
        %530 = vmax.xlane.f32.xlu0 %v525
        %v531 = vpop.xlane.xlu0 %530
        %v532 = vsub.f32 %v520, %v529
        %v533 = vsub.f32 %v525, %v531
        %v534 = vmul.f32 %v532, 1.442695
        %v535 = vpow.pop %v534
        %v536 = vmul.f32 %v533, 1.442695
        %v537 = vpow.pop %v536
        %538 = vadd.xlane.f32.xlu0 %v535
        %v539 = vpop.xlane.xlu0 %538
        %540 = vadd.xlane.f32.xlu0 %v537
        %v541 = vpop.xlane.xlu0 %540
        %v542 = vrcp.pop %v539
        %v543 = vmul.f32 %v535, %v542
        %v544 = vrcp.pop %v541
        %v545 = vmul.f32 %v537, %v544
        %v546 = vmul.f32 %v543, 16.0
        %v547 = vmul.f32 %v545, 16.0
        %v548 = vadd.f32 %v546, 1e-10
        %v549 = vadd.f32 %v547, 1e-10
        %v550 = vlog2.pop %v548
        %v551 = vmul.f32 %v550, 0.6931472
        %v552 = vlog2.pop %v549
        %v553 = vmul.f32 %v552, 0.6931472
        %v554 = vmul.f32 %v543, %v551
        %v555 = vmul.f32 %v545, %v553
        %556 = vadd.xlane.f32.xlu0 %v554
        %v557 = vpop.xlane.xlu0 %556
        %558 = vadd.xlane.f32.xlu0 %v555
        %v559 = vpop.xlane.xlu0 %558
        %s560 = smul.u32 %s37, 16
        %v561 = vlaneseq
        %v562 = vshrl.u32 %v561, 7
        %v563 = vadd.s32 %v562, 8
        %v564 = vstv %s560
        %v565 = vadd.s32 %v564, %v562
        %v566 = vadd.s32 %v564, %v563
        %vm567 = vcmp.lt.s32.totalorder %v565, 46
        %vm568 = vcmp.lt.s32.totalorder %v566, 46
        %v569 = vsel %vm567, 1, 0
        %v570 = vsel %vm568, 1, 0
        %v571 = vcvt.s32.f32 %v569
        %v572 = vcvt.s32.f32 %v570
        %s573 = sld [smem:[#allocation2]]
        %v574 = vmul.f32 %v557, %v571
        %v575 = vmul.f32 %v559, %v572
        %vm576 = vcmask 7168
        %v577 = vsel %vm576, %v574, 0.0
        %v578 = vsel %vm576, %v575, 0.0
        %v579 = vadd.f32 %v577, %v578
        %580 = vadd.xlane.f32.xlu0 %v579
        %v581 = vpop.xlane.xlu0 %580
        %v582 = vrot.slane %v581, 4
        %v583 = vadd.f32 %v581, %v582
        %v584 = vrot.slane %v583, 2
        %v585 = vadd.f32 %v583, %v584
        %v586 = vrot.slane %v585, 1
        %v587 = vadd.f32 %v585, %v586
        %s588 = vtos %v587
        %s589 = sadd.f32 %s573, %s588
        %s590 = scalar_lea.smem [#allocation2], 0
        %591 = sst [smem:[%s590]] %s589
        %v592 = vld [vmem:[%s345] sm:$0xff]
        %v593 = vld [vmem:[%s345 + $0x8] sm:$0xff]
        %v594 = vadd.f32 %v520, %v592
        %v595 = vadd.f32 %v525, %v593
        %596 = vmax.xlane.f32.xlu0 %v594
        %v597 = vpop.xlane.xlu0 %596
        %598 = vmax.xlane.f32.xlu0 %v595
        %v599 = vpop.xlane.xlu0 %598
        %v600 = vsub.f32 %v594, %v597
        %v601 = vsub.f32 %v595, %v599
        %v602 = vmul.f32 %v600, 1.442695
        %v603 = vpow.pop %v602
        %v604 = vmul.f32 %v601, 1.442695
        %v605 = vpow.pop %v604
        %606 = vadd.xlane.f32.xlu0 %v603
        %v607 = vpop.xlane.xlu0 %606
        %608 = vadd.xlane.f32.xlu0 %v605
        %v609 = vpop.xlane.xlu0 %608
        %v610 = vrcp.pop %v607
        %v611 = vmul.f32 %v603, %v610
        %v612 = vrcp.pop %v609
        %v613 = vmul.f32 %v605, %v612
        %614 = vst [vmem:[%s405] sm:$0xff] %v611
        %615 = vst [vmem:[%s405 + $0x8] sm:$0xff] %v613
        %v616 = vld [vmem:[%s354] sm:$0xff]
        %v617 = vld [vmem:[%s354 + $0x8] sm:$0xff]
        %v618 = vld [vmem:[%s354 + $0x10] sm:$0xff]
        %v619 = vld [vmem:[%s354 + $0x18] sm:$0xff]
        %v620 = vld [vmem:[%s354 + $0x20] sm:$0xff]
        %v621 = vld [vmem:[%s354 + $0x28] sm:$0xff]
        %v622 = vld [vmem:[%s354 + $0x30] sm:$0xff]
        %v623 = vld [vmem:[%s354 + $0x38] sm:$0xff]
        %v624 = vld [vmem:[%s354 + $0x40] sm:$0xff]
        %v625 = vld [vmem:[%s354 + $0x48] sm:$0xff]
        %v626 = vld [vmem:[%s354 + $0x50] sm:$0xff]
        %v627 = vld [vmem:[%s354 + $0x58] sm:$0xff]
        %v628 = vld [vmem:[%s354 + $0x60] sm:$0xff]
        %v629 = vld [vmem:[%s354 + $0x68] sm:$0xff]
        %v630 = vld [vmem:[%s354 + $0x70] sm:$0xff]
        %v631 = vld [vmem:[%s354 + $0x78] sm:$0xff]
        %632 = vmatprep.subr.mxu0 0.0
        %633 = vmatpush1.msra.mxu0 %v616
        %634 = vmatprep.subr.mxu0 0.0
        %635 = vmatpush1.msra.mxu0 %v617
        %636 = vmatprep.subr.mxu0 0.0
        %637 = vmatpush1.msra.mxu0 %v618
        %638 = vmatprep.subr.mxu0 0.0
        %639 = vmatpush1.msra.mxu0 %v619
        %640 = vmatprep.subr.mxu0 0.0
        %641 = vmatpush1.msra.mxu0 %v620
        %642 = vmatprep.subr.mxu0 0.0
        %643 = vmatpush1.msra.mxu0 %v621
        %644 = vmatprep.subr.mxu0 0.0
        %645 = vmatpush1.msra.mxu0 %v622
        %646 = vmatprep.subr.mxu0 0.0
        %647 = vmatpush1.msra.mxu0 %v623
        %648 = vmatprep.subr.mxu0 0.0
        %649 = vmatpush1.msra.mxu0 %v624
        %650 = vmatprep.subr.mxu0 0.0
        %651 = vmatpush1.msra.mxu0 %v625
        %652 = vmatprep.subr.mxu0 0.0
        %653 = vmatpush1.msra.mxu0 %v626
        %654 = vmatprep.subr.mxu0 0.0
        %655 = vmatpush1.msra.mxu0 %v627
        %656 = vmatprep.subr.mxu0 0.0
        %657 = vmatpush1.msra.mxu0 %v628
        %658 = vmatprep.subr.mxu0 0.0
        %659 = vmatpush1.msra.mxu0 %v629
        %660 = vmatprep.subr.mxu0 0.0
        %661 = vmatpush1.msra.mxu0 %v630
        %662 = vmatprep.subr.mxu0 0.0
        %663 = vmatpush1.msra.mxu0 %v631
        %664 = vmatprep.subr.mxu0 0.0
        %665 = vmatpush1.msra.mxu0 0.0
        %666 = vmatprep.subr.mxu0 0.0
        %667 = vmatpush1.msra.mxu0 0.0
        %668 = vmatprep.subr.mxu0 0.0
        %669 = vmatpush1.msra.mxu0 0.0
        %670 = vmatprep.subr.mxu0 0.0
        %671 = vmatpush1.msra.mxu0 0.0
        %672 = vmatprep.subr.mxu0 0.0
        %673 = vmatpush1.msra.mxu0 0.0
        %674 = vmatprep.subr.mxu0 0.0
        %675 = vmatpush1.msra.mxu0 0.0
        %676 = vmatprep.subr.mxu0 0.0
        %677 = vmatpush1.msra.mxu0 0.0
        %678 = vmatprep.subr.mxu0 0.0
        %679 = vmatpush1.msra.mxu0 0.0
        %680 = vmatprep.subr.mxu0 0.0
        %681 = vmatpush1.msra.mxu0 0.0
        %682 = vmatprep.subr.mxu0 0.0
        %683 = vmatpush1.msra.mxu0 0.0
        %684 = vmatprep.subr.mxu0 0.0
        %685 = vmatpush1.msra.mxu0 0.0
        %686 = vmatprep.subr.mxu0 0.0
        %687 = vmatpush1.msra.mxu0 0.0
        %688 = vmatprep.subr.mxu0 0.0
        %689 = vmatpush1.msra.mxu0 0.0
        %690 = vmatprep.subr.mxu0 0.0
        %691 = vmatpush1.msra.mxu0 0.0
        %692 = vmatprep.subr.mxu0 0.0
        %693 = vmatpush1.msra.mxu0 0.0
        %694 = vmatprep.subr.mxu0 0.0
        %695 = vmatpush1.msra.mxu0 0.0
        %696 = vmatprep.mubr.f32.mxu0 0.0
        %697 = vmatmul.mubr.f32.gmra.mrb[0].mxu0 %v611
        %v698 = vpop.f32.mrb[0].mxu0
        %v699 = vadd.f32 0.0, %v698
        %v700 = vpop.f32.mrb[0].mxu0
        %701 = vmatprep.mubr.f32.mxu0 0.0
        %702 = vmatmul.mubr.f32.gmra.mrb[0].mxu0 %v613
        %v703 = vpop.f32.mrb[0].mxu0
        %v704 = vadd.f32 0.0, %v703
        %v705 = vpop.f32.mrb[0].mxu0
        %706 = vdwg.mxu0
        %707 = vst [vmem:[%s398] sm:$0xff] %v699
        %708 = vst [vmem:[%s398 + $0x8] sm:$0xff] %v704
        %p709 = scmp.eq.s32.totalorder %s36, 1
        %p710 = scmp.eq.s32.totalorder %s37, 2
        %p711 = pnand %p709, %p710
        %p712 = pneg %p711
        // Predicated region
        $region53: #{tpu_custom_call.1} parent=39 // pred_check
          _
        $region54: #{tpu_custom_call.1} parent=39 // pred_check_branch
          %714 = sbr.rel (%p711) target = $region56
        $region55: #{tpu_custom_call.1} parent=39 // pred_region
          %s715 = sld [smem:[#allocation2]]
          %s716 = smul.f32 %s715, 1.0869565e-05
          %s717 = scalar_lea.smem [#allocation12], 0
          %718 = sst [smem:[%s717]] %s716
        $region56: #{tpu_custom_call.1} parent=39 // pred_fallthru
          _
        %s719 = sand.u32 %s186, 1
        %s720 = scalar_lea.sflag [#allocation5], %s719
        %s721 = sand.u32 %s186, 1
        %s722 = smul.addr %s721, 16
        %s723 = scalar_lea.vmem [#allocation9], %s722
        %s724 = sand.u32 %s214, 1
        %s725 = scalar_lea.sflag [#allocation11], %s724
        %s726 = sand.u32 %s214, 1
        %s727 = smul.addr %s726, 16
        %s728 = scalar_lea.vmem [#allocation10], %s727
        // Predicated region
        $region57: #{tpu_custom_call.1} parent=39 // pred_check
          %p729 = pneg %p196
        $region58: #{tpu_custom_call.1} parent=39 // pred_check_branch
          %731 = sbr.rel (%p729) target = $region60
        $region59: #{tpu_custom_call.1} parent=39 // pred_region
          %s732 = smul.u32 2, %s37
          %s734 = ssub.s32 256, 256
          %735 = vsyncadd %s720, %s734
          %s736 = smul.addr %s36, 6
          %s737 = sadd.s32 %s732, %s736
          %s738 = smul.addr %s737, 128
          %s739 = scalar_lea.hbm %s5, %s738
          %s740 = sshll.u32 %s723, 4
          %s741 = int_to_ptr.vmem [resolvable:$true] %s740
          %746 = dma.vmem_to_hbm [thread:$0]  %s741, 256, %s739, %s720, 128, 128, 8
        $region60: #{tpu_custom_call.1} parent=39 // pred_fallthru
          _
        // Predicated region
        $region61: #{tpu_custom_call.1} parent=39 // pred_check
          %p747 = pneg %p224
        $region62: #{tpu_custom_call.1} parent=39 // pred_check_branch
          %749 = sbr.rel (%p747) target = $region64
        $region63: #{tpu_custom_call.1} parent=39 // pred_region
          %s750 = smul.u32 2, %s37
          %s752 = ssub.s32 256, 256
          %753 = vsyncadd %s725, %s752
          %s754 = smul.addr %s36, 6
          %s755 = sadd.s32 %s750, %s754
          %s756 = smul.addr %s755, 128
          %s757 = scalar_lea.hbm %s6, %s756
          %s758 = sshll.u32 %s728, 4
          %s759 = int_to_ptr.vmem [resolvable:$true] %s758
          %764 = dma.vmem_to_hbm [thread:$0]  %s759, 256, %s757, %s725, 128, 128, 8
        $region64: #{tpu_custom_call.1} parent=39 // pred_fallthru
          _
        // Predicated region
        $region65: #{tpu_custom_call.1} parent=39 // pred_check
          %p765 = pneg %p245
        $region66: #{tpu_custom_call.1} parent=39 // pred_check_branch
          %767 = sbr.rel (%p765) target = $region68
        $region67: #{tpu_custom_call.1} parent=39 // pred_region
          %s769 = ssub.s32 16, 16
          %770 = vsyncadd [#allocation6], %s769
          %773 = dma.smem_to_hbm [#allocation12], 16, %s7, [#allocation6]
        $region68: #{tpu_custom_call.1} parent=39 // pred_fallthru
          _
        // Predicated region
        $region69: #{tpu_custom_call.1} parent=39 // pred_check
          %p774 = pneg %p245
        $region70: #{tpu_custom_call.1} parent=39 // pred_check_branch
          %776 = sbr.rel (%p774) target = $region72
        $region71: #{tpu_custom_call.1} parent=39 // pred_region
          %777 = dma.done [#allocation6], 16
        $region72: #{tpu_custom_call.1} parent=39 // pred_fallthru
          _
        %778 = sfence
      $region40: #{tpu_custom_call.1} parent=5 // pred_fallthru
        _
      %p779 = scmp.le.s32.totalorder 2, %s27
      // Predicated region
      $region73: #{tpu_custom_call.1} parent=5 // pred_check
        %p780 = pneg %p779
      $region74: #{tpu_custom_call.1} parent=5 // pred_check_branch
        %782 = sbr.rel (%p780) target = $region76
      $region75: #{tpu_custom_call.1} parent=5 // pred_region
        %s783 = ssub.s32 %s27, 2
        // Predicated region
        $region77: #{tpu_custom_call.1} parent=75 // pred_check
          %p784 = pneg %p202
        $region78: #{tpu_custom_call.1} parent=75 // pred_check_branch
          %786 = sbr.rel (%p784) target = $region80
        $region79: #{tpu_custom_call.1} parent=75 // pred_region
          %s787 = sand.u32 %s187, 1
          %s788 = scalar_lea.sflag [#allocation5], %s787
          %s789 = sand.u32 %s187, 1
          %s790 = smul.addr %s789, 16
          %s791 = scalar_lea.vmem [#allocation9], %s790
          %792 = dma.done %s788, 256
        $region80: #{tpu_custom_call.1} parent=75 // pred_fallthru
          _
        // Predicated region
        $region81: #{tpu_custom_call.1} parent=75 // pred_check
          %p793 = pneg %p230
        $region82: #{tpu_custom_call.1} parent=75 // pred_check_branch
          %795 = sbr.rel (%p793) target = $region84
        $region83: #{tpu_custom_call.1} parent=75 // pred_region
          %s796 = sand.u32 %s215, 1
          %s797 = scalar_lea.sflag [#allocation11], %s796
          %s798 = sand.u32 %s215, 1
          %s799 = smul.addr %s798, 16
          %s800 = scalar_lea.vmem [#allocation10], %s799
          %801 = dma.done %s797, 256
        $region84: #{tpu_custom_call.1} parent=75 // pred_fallthru
          _
      $region76: #{tpu_custom_call.1} parent=5 // pred_fallthru
        _
    $region6: #{tpu_custom_call.1} parent=1 // loop_footer
      %s31 = sadd.s32 1, %s27
    $region7: #{tpu_custom_call.1} parent=1 // loop_footer_branch
      %26 = sbr.rel target = $region3
    $region8: #{tpu_custom_call.1} parent=1 // loop_exit
      _
    %802 = vsyncpa [#allocation4], 1
    %s803 = scalar_lea.sflag [#allocation4], 1
    %804 = vsyncpa %s803, 1
    %805 = vsyncpa [#allocation8], 1
    %s806 = scalar_lea.sflag [#allocation8], 1
    %807 = vsyncpa %s806, 1
    %808 = vsyncpa [#allocation5], 1
    %s809 = scalar_lea.sflag [#allocation5], 1
    %810 = vsyncpa %s809, 1
    %811 = vsyncpa [#allocation11], 1
    %s812 = scalar_lea.sflag [#allocation11], 1
    %813 = vsyncpa %s812, 1
    %814 = vsyncpa [#allocation6], 1
    %s815 = scalar_lea.sflag [#allocation6], 1
    %816 = vsyncpa %s815, 1

</llo_original>
